<compile_context>
chip_gen: v7x
topology: tpu7x:2x2x1
jax: 0.10.0
libtpu: 0.0.40
codegen_flags: <defaults>
</compile_context>

<pallas_src>
import jax
import jax.numpy as jnp
from jax.experimental import pallas as pl
from jax.experimental.pallas import tpu as pltpu


def _round_up(x, m):
    return (x + m - 1) // m * m


def cdown_kernel(pm_ref, ph_ref, wcat_ref, b2_ref, o_ref):
    # pm_ref  : (1, RB, Wop, 4C)   main pre-conv rows for this block (op dtype)
    # ph_ref  : (1, 2,  Wop, 4C)   2-row halo (rows immediately after the mains)
    # wcat_ref: (4C, 9*Cpad)       fused (conv1 + residual) x conv2; tap = dh*3+dw,
    #                              each tap group padded to Cpad lanes
    # b2_ref  : (1, Cpad)          effective bias (b2 + b1 folded through conv2), f32
    # o_ref   : (1, RB, Wop, Cpad) f32; (h, w, :C) valid for h < Hout, w < Wout,
    #                              the rest is cropped by the wrapper.
    _, RB, Wop, C4 = pm_ref.shape
    Cpad = o_ref.shape[-1]
    Lb = RB * Wop

    # Assemble the (RB+2)-row pre-conv slab for this block; 8 extra zero rows keep
    # every shifted slice below in bounds (max shift = 2*Wop + 2).
    p = jnp.concatenate(
        [pm_ref[0].reshape(Lb, C4),
         ph_ref[0].reshape(2 * Wop, C4),
         jnp.zeros((8, C4), pm_ref.dtype)], axis=0)

    # Single MXU matmul: per-tap contributions for every pre-conv pixel (f32 acc).
    z = jnp.dot(p, wcat_ref[...], preferred_element_type=jnp.float32)

    # 3x3 valid conv = 9 shifted slice-adds over the whole block at once.
    acc = jnp.broadcast_to(b2_ref[...].astype(jnp.float32), (Lb, Cpad))
    for dh in range(3):
        for dw in range(3):
            tap = dh * 3 + dw
            off = dh * Wop + dw                     # constant row shift
            acc = acc + z[off:off + Lb, tap * Cpad:(tap + 1) * Cpad]

    o_ref[0] = acc.reshape(RB, Wop, Cpad).astype(o_ref.dtype)


def _choose_rows_per_block(Hout, Wop, C4, Cpad, op_bytes,
                           budget_bytes=12 * 1024 * 1024):
    """Largest even row block whose per-step working set fits a conservative budget."""
    per_row = Wop * (9 * Cpad * 4           # z rows (f32)
                     + 2 * C4 * op_bytes    # double-buffered patch rows
                     + 3 * Cpad * 4)        # double-buffered out + acc rows
    fixed = 2 * Wop * (9 * Cpad * 4 + 2 * C4 * op_bytes) + 8 * (9 * Cpad + C4) * 4
    rb = max(2, int((budget_bytes - fixed) // max(per_row, 1)))
    rb = min(rb, _round_up(Hout, 2))
    return max(2, rb - (rb % 2))


def cdown_forward(x, w1, b1, w2, b2, *, operand_dtype=jnp.bfloat16,
                  rows_per_block=None):
    """x: (N, C, H, W) float32 NCHW.  Returns (N, C, H//2 - 2, W//2 - 2) f32 NCHW."""
    N, C, H, W = x.shape
    assert H % 2 == 0 and W % 2 == 0
    C4 = 4 * C
    Ho, Wo = H // 2, W // 2
    Hout, Wout = Ho - 2, Wo - 2
    assert Hout > 0 and Wout > 0

    Cpad = _round_up(C, 128)            # lane-align tap groups and the output store
    Wop = _round_up(Wo, 8)              # sublane-align the dh*Wo row shifts
    op_bytes = jnp.dtype(operand_dtype).itemsize

    if rows_per_block is None:
        RB = _choose_rows_per_block(Hout, Wop, C4, Cpad, op_bytes)
    else:
        RB = max(2, rows_per_block + (rows_per_block % 2))   # keep even (halo spec)
    NB = -(-Hout // RB)
    Ho_pad = NB * RB + 2                # main rows + trailing halo, zero padded

    # ---- layout glue: 2x2 stride-2 patches; channel order c*4 + i*2 + j matches
    #      both PixelUnshuffle and the flattened conv1 weight.
    p = (x.reshape(N, C, Ho, 2, Wo, 2)
          .transpose(0, 2, 4, 1, 3, 5)
          .reshape(N, Ho, Wo, C4))
    p = jnp.pad(p, ((0, 0), (0, Ho_pad - Ho), (0, Wop - Wo), (0, 0)))
    p = p.astype(operand_dtype)

    # ---- parameter packing / algebraic fusion (done in f32; operands cast last)
    w1t = w1.reshape(C4, C4).T.astype(jnp.float32)
    w1_eff = w1t + jnp.eye(C4, dtype=jnp.float32)              # residual folded in
    w2f = jnp.transpose(w2, (2, 3, 1, 0)).reshape(9, C4, C).astype(jnp.float32)
    wcat = jnp.einsum('km,tmc->ktc', w1_eff, w2f)              # (4C, 9, C)
    wcat = jnp.pad(wcat, ((0, 0), (0, 0), (0, Cpad - C)))      # lane-align each tap
    wcat = wcat.reshape(C4, 9 * Cpad).astype(operand_dtype)
    b2_eff = b2.astype(jnp.float32) + jnp.einsum('m,tmc->c', b1.astype(jnp.float32), w2f)
    b2_eff = jnp.pad(b2_eff, (0, Cpad - C)).reshape(1, Cpad)

    out_rows = NB * RB
    flops = int(2 * N * NB * ((RB + 2) * Wop + 8) * C4 * (9 * Cpad)
                + 10 * N * NB * RB * Wop * Cpad)
    bytes_accessed = int(
        op_bytes * (N * Ho_pad * Wop * C4 * (1 + 2.0 / RB) + C4 * 9 * Cpad)
        + 4 * (Cpad + N * out_rows * Wop * Cpad))

    slab = pl.pallas_call(
        cdown_kernel,
        out_shape=jax.ShapeDtypeStruct((N, out_rows, Wop, Cpad), jnp.float32),
        grid=(N, NB),
        in_specs=[
            # main pre-conv rows of this block
            pl.BlockSpec((1, RB, Wop, C4), lambda n, rb: (n, rb, 0, 0)),
            # 2-row halo: the rows immediately after the main rows (RB even, so
            # the element offset (rb+1)*RB is a multiple of the block size 2)
            pl.BlockSpec((1, 2, Wop, C4),
                         lambda n, rb: (n, (rb + 1) * (RB // 2), 0, 0)),
            # fused weights / bias stay resident across the whole grid
            pl.BlockSpec((C4, 9 * Cpad), lambda n, rb: (0, 0)),
            pl.BlockSpec((1, Cpad), lambda n, rb: (0, 0)),
        ],
        out_specs=pl.BlockSpec((1, RB, Wop, Cpad), lambda n, rb: (n, rb, 0, 0)),
        compiler_params=pltpu.CompilerParams(
            dimension_semantics=("parallel", "parallel"),
            # explicit budget: above v5e's 16-MiB default, safe on v7x's 64-MiB
            # part; raise on v6e/v5e (128 MiB physical) for larger row blocks.
            vmem_limit_bytes=32 * 1024 * 1024),
        cost_estimate=pl.CostEstimate(
            flops=flops, transcendentals=0, bytes_accessed=bytes_accessed),
    )(p, p, wcat, b2_eff)

    # ---- crop the valid region (padded rows/cols/lanes are garbage) -> NCHW.
    out_nhwc = slab[:, :Hout, :Wout, :C]
    return jnp.transpose(out_nhwc, (0, 3, 1, 2))


def cdown_ref(x, w1, b1, w2, b2):
    """Pure-JAX reference mirroring the PyTorch module exactly (NCHW, f32)."""
    N, C, H, W = x.shape
    x_c = jax.lax.conv_general_dilated(
        x, w1, window_strides=(2, 2), padding="VALID",
        dimension_numbers=("NCHW", "OIHW", "NCHW")) + b1[None, :, None, None]
    # PixelUnshuffle(2): out[n, c*4+i*2+j, h, w] = x[n, c, 2h+i, 2w+j]
    x_s = (x.reshape(N, C, H // 2, 2, W // 2, 2)
            .transpose(0, 1, 3, 5, 2, 4)
            .reshape(N, 4 * C, H // 2, W // 2))
    y = x_c + x_s
    out = jax.lax.conv_general_dilated(
        y, w2, window_strides=(1, 1), padding="VALID",
        dimension_numbers=("NCHW", "OIHW", "NCHW")) + b2[None, :, None, None]
    return out


if __name__ == "__main__":
    N, C, H, W = 2, 4, 16, 16
    C4 = 4 * C

    key = jax.random.PRNGKey(0)
    kx, k1, kb1, k2, kb2 = jax.random.split(key, 5)

    x = jax.random.normal(kx, (N, C, H, W), jnp.float32)

    # Deterministic synthetic parameters (PyTorch-like uniform scaling by fan-in).
    fan1 = C * 2 * 2
    w1 = jax.random.uniform(k1, (C4, C, 2, 2), jnp.float32, -1.0, 1.0) / jnp.sqrt(fan1)
    b1 = jax.random.uniform(kb1, (C4,), jnp.float32, -1.0, 1.0) / jnp.sqrt(fan1)
    fan2 = C4 * 3 * 3
    w2 = jax.random.uniform(k2, (C, C4, 3, 3), jnp.float32, -1.0, 1.0) / jnp.sqrt(fan2)
    b2 = jax.random.uniform(kb2, (C,), jnp.float32, -1.0, 1.0) / jnp.sqrt(fan2)

    ref = jax.block_until_ready(cdown_ref(x, w1, b1, w2, b2))

    # 1) f32-operand path (exactness check, 3 row blocks of 2 output rows each).
    out32 = jax.block_until_ready(
        cdown_forward(x, w1, b1, w2, b2,
                      operand_dtype=jnp.float32, rows_per_block=2))
    assert out32.shape == (N, C, H // 2 - 2, W // 2 - 2), out32.shape
    err32 = float(jnp.max(jnp.abs(out32 - ref)))
    if err32 > 2e-4:
        raise AssertionError(f"f32 Pallas kernel mismatch vs reference: {err32}")

    # 2) bf16-operand fast path (default; f32 accumulate, 2 row blocks of 4 rows).
    outbf = jax.block_until_ready(
        cdown_forward(x, w1, b1, w2, b2, rows_per_block=4))
    errbf = float(jnp.max(jnp.abs(outbf - ref)))
    if errbf > 5e-2:   # bf16 operand rounding over 144 MACs; |out| ~ O(1)
        raise AssertionError(f"bf16 Pallas kernel mismatch vs reference: {errbf}")

    print("KERNEL_OK")
</pallas_src>

<mosaic_0001>
module attributes {stable_mosaic.version = 11 : i64} {
  func.func @cdown_kernel(%arg0: i32, %arg1: i32, %arg2: memref<1x2x8x16xf32, #tpu.memory_space<vmem>>, %arg3: memref<1x2x8x16xf32, #tpu.memory_space<vmem>>, %arg4: memref<16x1152xf32, #tpu.memory_space<vmem>>, %arg5: memref<1x128xf32, #tpu.memory_space<vmem>>, %arg6: memref<1x2x8x128xf32, #tpu.memory_space<vmem>>) attributes {dimension_semantics = [#tpu.dimension_semantics<parallel>, #tpu.dimension_semantics<parallel>], iteration_bounds = array<i64: 2, 3>, scalar_prefetch = 0 : i64, scratch_operands = 0 : i64, tpu.core_type = #tpu.core_type<tc>, window_params = [{transform_indices = @transform_0, window_bounds = array<i64: 1, 2, 8, 16>}, {transform_indices = @transform_1, window_bounds = array<i64: 1, 2, 8, 16>}, {pipeline_mode = #tpu.pipeline_mode<synchronous>, transform_indices = @transform_2, window_bounds = array<i64: 16, 1152>}, {pipeline_mode = #tpu.pipeline_mode<synchronous>, transform_indices = @transform_3, window_bounds = array<i64: 1, 128>}, {transform_indices = @transform_4, window_bounds = array<i64: 1, 2, 8, 128>}]} {
    %c0 = arith.constant 0 : index
    %c0_0 = arith.constant 0 : index
    %c0_1 = arith.constant 0 : index
    %c0_2 = arith.constant 0 : index
    %0 = vector.load %arg2[%c0, %c0_0, %c0_1, %c0_2] : memref<1x2x8x16xf32, #tpu.memory_space<vmem>>, vector<1x2x8x16xf32>
    %1 = vector.shape_cast %0 : vector<1x2x8x16xf32> to vector<2x8x16xf32>
    %2 = vector.shape_cast %1 : vector<2x8x16xf32> to vector<16x16xf32>
    %c0_3 = arith.constant 0 : index
    %c0_4 = arith.constant 0 : index
    %c0_5 = arith.constant 0 : index
    %c0_6 = arith.constant 0 : index
    %3 = vector.load %arg3[%c0_3, %c0_4, %c0_5, %c0_6] : memref<1x2x8x16xf32, #tpu.memory_space<vmem>>, vector<1x2x8x16xf32>
    %4 = vector.shape_cast %3 : vector<1x2x8x16xf32> to vector<2x8x16xf32>
    %5 = vector.shape_cast %4 : vector<2x8x16xf32> to vector<16x16xf32>
    %cst = arith.constant 0.000000e+00 : f32
    %6 = vector.broadcast %cst : f32 to vector<8x16xf32>
    %7 = tpu.concatenate %2, %5, %6 in 0 : vector<16x16xf32>, vector<16x16xf32>, vector<8x16xf32> -> vector<40x16xf32>
    %c0_7 = arith.constant 0 : index
    %c0_8 = arith.constant 0 : index
    %8 = vector.load %arg4[%c0_7, %c0_8] : memref<16x1152xf32, #tpu.memory_space<vmem>>, vector<16x1152xf32>
    %cst_9 = arith.constant dense<0.000000e+00> : vector<40x1152xf32>
    %9 = tpu.matmul %7, %8, %cst_9 {dimension_numbers = #tpu.dot_dimension_numbers<[1], [0], [0], [1], [0, 0, 1, 1], [], []>} : vector<40x16xf32>, vector<16x1152xf32>, vector<40x1152xf32> -> vector<40x1152xf32>
    %c0_10 = arith.constant 0 : index
    %c0_11 = arith.constant 0 : index
    %10 = vector.load %arg5[%c0_10, %c0_11] : memref<1x128xf32, #tpu.memory_space<vmem>>, vector<1x128xf32>
    %11 = vector.shape_cast %10 : vector<1x128xf32> to vector<1x128xf32>
    %12 = vector.broadcast %11 : vector<1x128xf32> to vector<16x128xf32>
    %13 = vector.extract_strided_slice %9 {offsets = [0, 0], sizes = [16, 128], strides = [1, 1]} : vector<40x1152xf32> to vector<16x128xf32>
    %14 = arith.addf %12, %13 : vector<16x128xf32>
    %15 = vector.extract_strided_slice %9 {offsets = [1, 128], sizes = [16, 128], strides = [1, 1]} : vector<40x1152xf32> to vector<16x128xf32>
    %16 = arith.addf %14, %15 : vector<16x128xf32>
    %17 = vector.extract_strided_slice %9 {offsets = [2, 256], sizes = [16, 128], strides = [1, 1]} : vector<40x1152xf32> to vector<16x128xf32>
    %18 = arith.addf %16, %17 : vector<16x128xf32>
    %19 = vector.extract_strided_slice %9 {offsets = [8, 384], sizes = [16, 128], strides = [1, 1]} : vector<40x1152xf32> to vector<16x128xf32>
    %20 = arith.addf %18, %19 : vector<16x128xf32>
    %21 = vector.extract_strided_slice %9 {offsets = [9, 512], sizes = [16, 128], strides = [1, 1]} : vector<40x1152xf32> to vector<16x128xf32>
    %22 = arith.addf %20, %21 : vector<16x128xf32>
    %23 = vector.extract_strided_slice %9 {offsets = [10, 640], sizes = [16, 128], strides = [1, 1]} : vector<40x1152xf32> to vector<16x128xf32>
    %24 = arith.addf %22, %23 : vector<16x128xf32>
    %25 = vector.extract_strided_slice %9 {offsets = [16, 768], sizes = [16, 128], strides = [1, 1]} : vector<40x1152xf32> to vector<16x128xf32>
    %26 = arith.addf %24, %25 : vector<16x128xf32>
    %27 = vector.extract_strided_slice %9 {offsets = [17, 896], sizes = [16, 128], strides = [1, 1]} : vector<40x1152xf32> to vector<16x128xf32>
    %28 = arith.addf %26, %27 : vector<16x128xf32>
    %29 = vector.extract_strided_slice %9 {offsets = [18, 1024], sizes = [16, 128], strides = [1, 1]} : vector<40x1152xf32> to vector<16x128xf32>
    %30 = arith.addf %28, %29 : vector<16x128xf32>
    %31 = vector.shape_cast %30 : vector<16x128xf32> to vector<2x8x128xf32>
    %c0_12 = arith.constant 0 : index
    %c0_13 = arith.constant 0 : index
    %c0_14 = arith.constant 0 : index
    %c0_15 = arith.constant 0 : index
    %32 = vector.load %arg6[%c0_12, %c0_13, %c0_14, %c0_15] : memref<1x2x8x128xf32, #tpu.memory_space<vmem>>, vector<1x2x8x128xf32>
    %33 = vector.shape_cast %32 : vector<1x2x8x128xf32> to vector<2x8x128xf32>
    %34 = vector.shape_cast %31 : vector<2x8x128xf32> to vector<1x2x8x128xf32>
    tpu.vector_store %arg6[%c0_12, %c0_13, %c0_14, %c0_15], %34 {strides = array<i32>} : memref<1x2x8x128xf32, #tpu.memory_space<vmem>>, vector<1x2x8x128xf32>,
    return
  }
  func.func @transform_0(%arg0: i32, %arg1: i32) -> (i32, i32, i32, i32) {
    %c0_i32 = arith.constant 0 : i32
    %c0_i32_0 = arith.constant 0 : i32
    %c0_i32_1 = arith.constant 0 : i32
    return %arg0, %arg1, %c0_i32, %c0_i32_0 : i32, i32, i32, i32
  }
  func.func @transform_1(%arg0: i32, %arg1: i32) -> (i32, i32, i32, i32) {
    %c1_i32 = arith.constant 1 : i32
    %0 = arith.addi %arg1, %c1_i32 : i32
    %c1_i32_0 = arith.constant 1 : i32
    %1 = arith.muli %0, %c1_i32_0 : i32
    %c0_i32 = arith.constant 0 : i32
    %c0_i32_1 = arith.constant 0 : i32
    %c0_i32_2 = arith.constant 0 : i32
    return %arg0, %1, %c0_i32, %c0_i32_1 : i32, i32, i32, i32
  }
  func.func @transform_2(%arg0: i32, %arg1: i32) -> (i32, i32) {
    %c0_i32 = arith.constant 0 : i32
    %c0_i32_0 = arith.constant 0 : i32
    %c0_i32_1 = arith.constant 0 : i32
    return %c0_i32, %c0_i32_0 : i32, i32
  }
  func.func @transform_3(%arg0: i32, %arg1: i32) -> (i32, i32) {
    %c0_i32 = arith.constant 0 : i32
    %c0_i32_0 = arith.constant 0 : i32
    %c0_i32_1 = arith.constant 0 : i32
    return %c0_i32, %c0_i32_0 : i32, i32
  }
  func.func @transform_4(%arg0: i32, %arg1: i32) -> (i32, i32, i32, i32) {
    %c0_i32 = arith.constant 0 : i32
    %c0_i32_0 = arith.constant 0 : i32
    %c0_i32_1 = arith.constant 0 : i32
    return %arg0, %arg1, %c0_i32, %c0_i32_0 : i32, i32, i32, i32
  }
}

</mosaic_0001>

<llo_original>
// kernel: tpu_custom_call.1
$region0: #{tpu_custom_call.1}
  #allocation0 [shape = 'u32[]', space=smem, size = 0x4, offset = 0x4, fixed_abs, tag = 'smem constant byte address 0x4 - core index']
  #allocation1 [shape = 'u32[144,128]{1,0:T(1,128)}', space=vmem, size = 0x12000, scoped, tag = 'internal scratch']
  %s0 = inlined_call_operand.hbm [shape: f32[2,8,8,16], index: 0, kind: input, shape index: {}]
  %s1 = inlined_call_operand.hbm [shape: f32[2,8,8,16], index: 1, kind: input, shape index: {}]
  %s2 = inlined_call_operand.hbm [shape: f32[16,1152], index: 2, kind: input, shape index: {}]
  %s3 = inlined_call_operand.vmem [shape: f32[1,128], index: 3, kind: input, shape index: {}]
  %s4 = inlined_call_operand.hbm [shape: f32[2,6,8,128], index: 4, kind: output, shape index: {}]
  %s5 = sld [smem:[#allocation0]]
  $region61: #{tpu_custom_call.1} parent=0
    _
  %s7 = ssub.s32 1, %s5
  %s8 = scalar_select 0, %s7, %s5
  $region1: #{tpu_custom_call.1} parent=0
    #allocation2 [shape = 'u8[16384]{0}', space=vmem, size = 0x4000, scoped, tag = 'input window, operand 0']
    #allocation3 [shape = 's32[2]{0}', space=sflag, size = 0x8, scoped, tag = 'scoped memory for tpu_custom_call.1']
    #allocation4 [shape = 's32[2]{0}', space=sflag, size = 0x8, scoped, tag = 'scoped memory for tpu_custom_call.1']
    #allocation5 [shape = 'u8[16384]{0}', space=vmem, size = 0x4000, scoped, tag = 'input window, operand 1']
    #allocation6 [shape = 's32[2]{0}', space=sflag, size = 0x8, scoped, tag = 'scoped memory for tpu_custom_call.1']
    #allocation7 [shape = 'u8[73728]{0}', space=vmem, size = 0x12000, scoped, tag = 'input window, operand 2, single buffered']
    #allocation8 [shape = 'u8[16384]{0}', space=vmem, size = 0x4000, scoped, tag = 'output window, operand 0']
    %9 = vsyncpa [#allocation3], 0
    %s10 = scalar_lea.sflag [#allocation3], 1
    %11 = vsyncpa %s10, 0
    %12 = vsyncpa [#allocation6], 0
    %s13 = scalar_lea.sflag [#allocation6], 1
    %14 = vsyncpa %s13, 0
    %15 = vsyncpa [#allocation4], 0
    %s16 = scalar_lea.sflag [#allocation4], 1
    %17 = vsyncpa %s16, 0
    loop: start=0, step=1, limit=8
    $region2: #{tpu_custom_call.1} parent=1 // loop_pre_header
      _
    $region3: #{tpu_custom_call.1} parent=1 // loop_header
      %s19 = sphi 0, %s23
      %p20 = scmp.ge.s32.totalorder %s19, 8
      %s26 = sphi 0, %s38
      %s27 = sphi 0, %s34
      %s28 = sphi 0, %s26
      %s29 = sphi 0, %s27
      %s30 = sphi 0, %s28
      %s31 = sphi 0, %s29
      %s43 = sphi 0, %s45
      %s46 = sphi 0, %s43
      %s47 = sphi 0, %s46
      %s63 = sphi 0, %s47
      %s73 = sphi 0, %s75
      %s76 = sphi 0, %s73
      %s77 = sphi 0, %s76
      %s93 = sphi 0, %s77
      %s97 = sphi 0, %s97
      %s99 = sphi 0, %s97
      %s100 = sphi 0, %s99
      %s114 = sphi 0, %s100
      %s118 = sphi 0, %s118
      %s120 = sphi 0, %s118
      %s121 = sphi 0, %s120
      %s135 = sphi 0, %s121
      %s143 = sphi 0, %s145
      %s146 = sphi 0, %s143
      %s147 = sphi 0, %s146
      %s163 = sphi 0, %s147
    $region4: #{tpu_custom_call.1} parent=1 // loop_header_branch
      %22 = sbr.rel (%p20) target = $region8
    $region5: #{tpu_custom_call.1} parent=1 // loop_body
      %s24 = ssub.s32 %s19, 1
      %s25 = ssub.s32 %s19, 2
      %s32 = sadd.s32 1, %s27
      %p33 = scmp.ge.s32.totalorder %s32, 3
      %s34 = scalar_select %p33, 0, %s32
      %s35 = sadd.s32 1, %s26
      %s36 = scalar_select %p33, %s35, %s26
      %p37 = scmp.ge.s32.totalorder %s36, 2
      %s38 = scalar_select %p37, 0, %s36
      %s39 = ssub.s32 %s26, %s38
      %s40 = ssub.s32 %s27, %s34
      %s41 = sor.u32 %s39, %s40
      %p42 = scmp.eq.s32.totalorder %s41, 0
      %s44 = sadd.s32 %s43, 1
      %s45 = scalar_select %p42, %s43, %s44
      %p48 = pneg %p42
      %p49 = scmp.eq.s32.totalorder %s19, 5
      %p50 = por %p48, %p49
      %p51 = scmp.ne.s32.totalorder %s43, %s46
      %p52 = scmp.eq.s32.totalorder %s19, 0
      %p53 = por %p51, %p52
      %p54 = scmp.ne.s32.totalorder %s43, %s46
      %p55 = scmp.eq.s32.totalorder %s24, 5
      %p56 = por %p54, %p55
      %p57 = scmp.ne.s32.totalorder %s46, %s47
      %p58 = scmp.eq.s32.totalorder %s24, 0
      %p59 = por %p57, %p58
      %p60 = scmp.ne.s32.totalorder %s46, %s47
      %p61 = scmp.eq.s32.totalorder %s25, 5
      %p62 = por %p60, %p61
      %p64 = scmp.ne.s32.totalorder %s47, %s63
      %p65 = scmp.eq.s32.totalorder %s25, 0
      %p66 = por %p64, %p65
      %s67 = sadd.s32 %s27, 1
      %s68 = sadd.s32 %s34, 1
      %s69 = ssub.s32 %s26, %s38
      %s70 = ssub.s32 %s67, %s68
      %s71 = sor.u32 %s69, %s70
      %p72 = scmp.eq.s32.totalorder %s71, 0
      %s74 = sadd.s32 %s73, 1
      %s75 = scalar_select %p72, %s73, %s74
      %p78 = pneg %p72
      %p79 = scmp.eq.s32.totalorder %s19, 5
      %p80 = por %p78, %p79
      %p81 = scmp.ne.s32.totalorder %s73, %s76
      %p82 = scmp.eq.s32.totalorder %s19, 0
      %p83 = por %p81, %p82
      %p84 = scmp.ne.s32.totalorder %s73, %s76
      %p85 = scmp.eq.s32.totalorder %s24, 5
      %p86 = por %p84, %p85
      %p87 = scmp.ne.s32.totalorder %s76, %s77
      %p88 = scmp.eq.s32.totalorder %s24, 0
      %p89 = por %p87, %p88
      %p90 = scmp.ne.s32.totalorder %s76, %s77
      %p91 = scmp.eq.s32.totalorder %s25, 5
      %p92 = por %p90, %p91
      %p94 = scmp.ne.s32.totalorder %s77, %s93
      %p95 = scmp.eq.s32.totalorder %s25, 0
      %p96 = por %p94, %p95
      %s98 = sadd.s32 %s97, 1
      %p101 = scmp.eq.s32.totalorder %s19, 5
      %p102 = scmp.ne.s32.totalorder %s97, %s99
      %p103 = scmp.eq.s32.totalorder %s19, 0
      %p104 = por %p102, %p103
      %p105 = scmp.ne.s32.totalorder %s97, %s99
      %p106 = scmp.eq.s32.totalorder %s24, 5
      %p107 = por %p105, %p106
      %p108 = scmp.ne.s32.totalorder %s99, %s100
      %p109 = scmp.eq.s32.totalorder %s24, 0
      %p110 = por %p108, %p109
      %p111 = scmp.ne.s32.totalorder %s99, %s100
      %p112 = scmp.eq.s32.totalorder %s25, 5
      %p113 = por %p111, %p112
      %p115 = scmp.ne.s32.totalorder %s100, %s114
      %p116 = scmp.eq.s32.totalorder %s25, 0
      %p117 = por %p115, %p116
      %s119 = sadd.s32 %s118, 1
      %p122 = scmp.eq.s32.totalorder %s19, 5
      %p123 = scmp.ne.s32.totalorder %s118, %s120
      %p124 = scmp.eq.s32.totalorder %s19, 0
      %p125 = por %p123, %p124
      %p126 = scmp.ne.s32.totalorder %s118, %s120
      %p127 = scmp.eq.s32.totalorder %s24, 5
      %p128 = por %p126, %p127
      %p129 = scmp.ne.s32.totalorder %s120, %s121
      %p130 = scmp.eq.s32.totalorder %s24, 0
      %p131 = por %p129, %p130
      %p132 = scmp.ne.s32.totalorder %s120, %s121
      %p133 = scmp.eq.s32.totalorder %s25, 5
      %p134 = por %p132, %p133
      %p136 = scmp.ne.s32.totalorder %s121, %s135
      %p137 = scmp.eq.s32.totalorder %s25, 0
      %p138 = por %p136, %p137
      %s139 = ssub.s32 %s26, %s38
      %s140 = ssub.s32 %s27, %s34
      %s141 = sor.u32 %s139, %s140
      %p142 = scmp.eq.s32.totalorder %s141, 0
      %s144 = sadd.s32 %s143, 1
      %s145 = scalar_select %p142, %s143, %s144
      %p148 = pneg %p142
      %p149 = scmp.eq.s32.totalorder %s19, 5
      %p150 = por %p148, %p149
      %p151 = scmp.ne.s32.totalorder %s143, %s146
      %p152 = scmp.eq.s32.totalorder %s19, 0
      %p153 = por %p151, %p152
      %p154 = scmp.ne.s32.totalorder %s143, %s146
      %p155 = scmp.eq.s32.totalorder %s24, 5
      %p156 = por %p154, %p155
      %p157 = scmp.ne.s32.totalorder %s146, %s147
      %p158 = scmp.eq.s32.totalorder %s24, 0
      %p159 = por %p157, %p158
      %p160 = scmp.ne.s32.totalorder %s146, %s147
      %p161 = scmp.eq.s32.totalorder %s25, 5
      %p162 = por %p160, %p161
      %p164 = scmp.ne.s32.totalorder %s147, %s163
      %p165 = scmp.eq.s32.totalorder %s25, 0
      %p166 = por %p164, %p165
      %p167 = scmp.le.s32.totalorder 1, %s19
      %p168 = scmp.lt.s32.totalorder %s19, 7
      %p169 = pnand %p167, %p168
      %p170 = pneg %p169
      // Predicated region
      $region9: #{tpu_custom_call.1} parent=5 // pred_check
        _
      $region10: #{tpu_custom_call.1} parent=5 // pred_check_branch
        %172 = sbr.rel (%p169) target = $region12
      $region11: #{tpu_custom_call.1} parent=5 // pred_region
        %s173 = ssub.s32 %s19, 1
        // Predicated region
        $region13: #{tpu_custom_call.1} parent=11 // pred_check
          %p174 = pneg %p110
        $region14: #{tpu_custom_call.1} parent=11 // pred_check_branch
          %176 = sbr.rel (%p174) target = $region16
        $region15: #{tpu_custom_call.1} parent=11 // pred_region
          %s178 = ssub.s32 2304, 2304
          %179 = vsyncadd [#allocation6], %s178
          %s180 = sshll.u32 [#allocation7], 4
          %s181 = int_to_ptr.vmem [resolvable:$true] %s180
          %186 = dma.hbm_to_vmem [thread:$0]  %s2, 2304, %s181, [#allocation6], 1152, 1152, 72
        $region16: #{tpu_custom_call.1} parent=11 // pred_fallthru
          _
        // Predicated region
        $region17: #{tpu_custom_call.1} parent=11 // pred_check
          %p187 = pneg %p131
        $region18: #{tpu_custom_call.1} parent=11 // pred_check_branch
          %189 = sbr.rel (%p187) target = $region20
        $region19: #{tpu_custom_call.1} parent=11 // pred_region
          _
        $region20: #{tpu_custom_call.1} parent=11 // pred_fallthru
          _
      $region12: #{tpu_custom_call.1} parent=5 // pred_fallthru
        _
      %p190 = scmp.lt.s32.totalorder %s19, 6
      // Predicated region
      $region21: #{tpu_custom_call.1} parent=5 // pred_check
        %p191 = pneg %p190
      $region22: #{tpu_custom_call.1} parent=5 // pred_check_branch
        %193 = sbr.rel (%p191) target = $region24
      $region23: #{tpu_custom_call.1} parent=5 // pred_region
        // Predicated region
        $region25: #{tpu_custom_call.1} parent=23 // pred_check
          %p194 = pneg %p53
        $region26: #{tpu_custom_call.1} parent=23 // pred_check_branch
          %196 = sbr.rel (%p194) target = $region28
        $region27: #{tpu_custom_call.1} parent=23 // pred_region
          %s197 = sand.u32 %s43, 1
          %s198 = scalar_lea.sflag [#allocation3], %s197
          %s199 = sand.u32 %s43, 1
          %s200 = smul.addr %s199, 16
          %s201 = scalar_lea.vmem [#allocation2], %s200
          %s202 = smul.u32 2, %s27
          %s204 = ssub.s32 256, 256
          %205 = vsyncadd %s198, %s204
          %s206 = smul.addr %s26, 8
          %s207 = sadd.s32 %s202, %s206
          %s208 = smul.addr %s207, 128
          %s209 = scalar_lea.hbm %s0, %s208
          %s210 = sshll.u32 %s201, 4
          %s211 = int_to_ptr.vmem [resolvable:$true] %s210
          %216 = dma.hbm_to_vmem [thread:$0]  %s209, 256, %s211, %s198, 128, 128, 8
        $region28: #{tpu_custom_call.1} parent=23 // pred_fallthru
          _
        // Predicated region
        $region29: #{tpu_custom_call.1} parent=23 // pred_check
          %p217 = pneg %p83
        $region30: #{tpu_custom_call.1} parent=23 // pred_check_branch
          %219 = sbr.rel (%p217) target = $region32
        $region31: #{tpu_custom_call.1} parent=23 // pred_region
          %s220 = sand.u32 %s19, 1
          %s221 = scalar_lea.sflag [#allocation6], %s220
          %s222 = sand.u32 %s73, 1
          %s223 = smul.addr %s222, 16
          %s224 = scalar_lea.vmem [#allocation5], %s223
          %s225 = sadd.s32 %s27, 1
          %s226 = smul.u32 2, %s225
          %s228 = ssub.s32 256, 256
          %229 = vsyncadd %s221, %s228
          %s230 = smul.addr %s26, 8
          %s231 = sadd.s32 %s226, %s230
          %s232 = smul.addr %s231, 128
          %s233 = scalar_lea.hbm %s1, %s232
          %s234 = sshll.u32 %s224, 4
          %s235 = int_to_ptr.vmem [resolvable:$true] %s234
          %240 = dma.hbm_to_vmem [thread:$0]  %s233, 256, %s235, %s221, 128, 128, 8
        $region32: #{tpu_custom_call.1} parent=23 // pred_fallthru
          _
      $region24: #{tpu_custom_call.1} parent=5 // pred_fallthru
        _
      %p241 = scmp.le.s32.totalorder 1, %s19
      %p242 = scmp.lt.s32.totalorder %s19, 7
      %p243 = pnand %p241, %p242
      %p244 = pneg %p243
      // Predicated region
      $region33: #{tpu_custom_call.1} parent=5 // pred_check
        _
      $region34: #{tpu_custom_call.1} parent=5 // pred_check_branch
        %246 = sbr.rel (%p243) target = $region36
      $region35: #{tpu_custom_call.1} parent=5 // pred_region
        %s247 = ssub.s32 %s19, 1
        %s248 = sand.u32 %s46, 1
        %s249 = scalar_lea.sflag [#allocation3], %s248
        %s250 = sand.u32 %s46, 1
        %s251 = smul.addr %s250, 16
        %s252 = scalar_lea.vmem [#allocation2], %s251
        // Predicated region
        $region37: #{tpu_custom_call.1} parent=35 // pred_check
          %p253 = pneg %p59
        $region38: #{tpu_custom_call.1} parent=35 // pred_check_branch
          %255 = sbr.rel (%p253) target = $region40
        $region39: #{tpu_custom_call.1} parent=35 // pred_region
          %256 = dma.done %s249, 256
        $region40: #{tpu_custom_call.1} parent=35 // pred_fallthru
          _
        %s257 = sand.u32 %s24, 1
        %s258 = scalar_lea.sflag [#allocation6], %s257
        %s259 = sand.u32 %s76, 1
        %s260 = smul.addr %s259, 16
        %s261 = scalar_lea.vmem [#allocation5], %s260
        // Predicated region
        $region41: #{tpu_custom_call.1} parent=35 // pred_check
          %p262 = pneg %p89
        $region42: #{tpu_custom_call.1} parent=35 // pred_check_branch
          %264 = sbr.rel (%p262) target = $region44
        $region43: #{tpu_custom_call.1} parent=35 // pred_region
          %265 = dma.done %s258, 256
        $region44: #{tpu_custom_call.1} parent=35 // pred_fallthru
          _
        // Predicated region
        $region45: #{tpu_custom_call.1} parent=35 // pred_check
          %p266 = pneg %p110
        $region46: #{tpu_custom_call.1} parent=35 // pred_check_branch
          %268 = sbr.rel (%p266) target = $region48
        $region47: #{tpu_custom_call.1} parent=35 // pred_region
          %269 = dma.done [#allocation6], 2304
        $region48: #{tpu_custom_call.1} parent=35 // pred_fallthru
          _
        %s270 = sand.u32 %s46, 1
        %s271 = scalar_lea.sflag [#allocation3], %s270
        %s272 = sand.u32 %s46, 1
        %s273 = smul.addr %s272, 16
        %s274 = scalar_lea.vmem [#allocation2], %s273
        %p275 = pneg %p59
        %p276 = pneg %p56
        %s277 = sand.u32 %s24, 1
        %s278 = scalar_lea.sflag [#allocation6], %s277
        %s279 = sand.u32 %s76, 1
        %s280 = smul.addr %s279, 16
        %s281 = scalar_lea.vmem [#allocation5], %s280
        %p282 = pneg %p89
        %p283 = pneg %p86
        %p284 = pneg %p110
        %p285 = pneg %p107
        %p286 = pneg %p131
        %p287 = pneg %p128
        %p288 = pneg %p159
        %p289 = pneg %p156
        %s290 = sand.u32 %s146, 1
        %s291 = scalar_lea.sflag [#allocation4], %s290
        %s292 = sand.u32 %s146, 1
        %s293 = smul.addr %s292, 16
        %s294 = scalar_lea.vmem [#allocation8], %s293
        %s295 = smul.u32 2, %s29
        %s296 = sadd.s32 %s29, 1
        %s297 = smul.u32 2, %s296
        %s298 = smul.u32 2, %s29
        %v299 = vld [vmem:[%s252] sm:$0xff]
        %v300 = vld [vmem:[%s252 + $0x8] sm:$0xff]
        %v301 = vld [vmem:[%s261] sm:$0xff]
        %v302 = vld [vmem:[%s261 + $0x8] sm:$0xff]
        %v303 = vld [vmem:[#allocation7] sm:$0xff]
        %v304 = vld [vmem:[#allocation7 + $0x8] sm:$0xff]
        %v305 = vld [vmem:[#allocation7 + $0x10] sm:$0xff]
        %v306 = vld [vmem:[#allocation7 + $0x18] sm:$0xff]
        %v307 = vld [vmem:[#allocation7 + $0x20] sm:$0xff]
        %v308 = vld [vmem:[#allocation7 + $0x28] sm:$0xff]
        %v309 = vld [vmem:[#allocation7 + $0x30] sm:$0xff]
        %v310 = vld [vmem:[#allocation7 + $0x38] sm:$0xff]
        %v311 = vld [vmem:[#allocation7 + $0x40] sm:$0xff]
        %v312 = vld [vmem:[#allocation7 + $0x48] sm:$0xff]
        %v313 = vld [vmem:[#allocation7 + $0x50] sm:$0xff]
        %v314 = vld [vmem:[#allocation7 + $0x58] sm:$0xff]
        %v315 = vld [vmem:[#allocation7 + $0x60] sm:$0xff]
        %v316 = vld [vmem:[#allocation7 + $0x68] sm:$0xff]
        %v317 = vld [vmem:[#allocation7 + $0x70] sm:$0xff]
        %v318 = vld [vmem:[#allocation7 + $0x78] sm:$0xff]
        %v319 = vld [vmem:[#allocation7 + $0x80] sm:$0xff]
        %v320 = vld [vmem:[#allocation7 + $0x88] sm:$0xff]
        %vm321 = vcmask 130048
        %v323 = vsel %vm321, %v299, 0
        %v326 = vsel %vm321, %v300, 0
        %v329 = vsel %vm321, %v301, 0
        %v332 = vsel %vm321, %v302, 0
        %v335 = vsel %vm321, 0.0, 0
        %337 = vmatprep.subr.mxu0 %v304
        %338 = vmatpush1.msra.mxu0 %v303
        %339 = vmatprep.subr.mxu0 %v313
        %340 = vmatpush1.msra.mxu0 %v312
        %341 = vmatprep.subr.mxu0 0.0
        %342 = vmatpush1.msra.mxu0 0.0
        %343 = vmatprep.subr.mxu0 0.0
        %344 = vmatpush1.msra.mxu0 0.0
        %345 = vmatprep.subr.mxu0 0.0
        %346 = vmatpush1.msra.mxu0 0.0
        %347 = vmatprep.subr.mxu0 0.0
        %348 = vmatpush1.msra.mxu0 0.0
        %349 = vmatprep.subr.mxu0 0.0
        %350 = vmatpush1.msra.mxu0 0.0
        %351 = vmatprep.subr.mxu0 0.0
        %352 = vmatpush1.msra.mxu0 0.0
        %353 = vmatprep.subr.mxu0 0.0
        %354 = vmatpush1.msra.mxu0 0.0
        %355 = vmatprep.subr.mxu0 0.0
        %356 = vmatpush1.msra.mxu0 0.0
        %357 = vmatprep.subr.mxu0 0.0
        %358 = vmatpush1.msra.mxu0 0.0
        %359 = vmatprep.subr.mxu0 0.0
        %360 = vmatpush1.msra.mxu0 0.0
        %361 = vmatprep.subr.mxu0 0.0
        %362 = vmatpush1.msra.mxu0 0.0
        %363 = vmatprep.subr.mxu0 0.0
        %364 = vmatpush1.msra.mxu0 0.0
        %365 = vmatprep.subr.mxu0 0.0
        %366 = vmatpush1.msra.mxu0 0.0
        %367 = vmatprep.subr.mxu0 0.0
        %368 = vmatpush1.msra.mxu0 0.0
        %369 = vmatprep.subr.mxu0 0.0
        %370 = vmatpush1.msra.mxu0 0.0
        %371 = vmatprep.subr.mxu0 0.0
        %372 = vmatpush1.msra.mxu0 0.0
        %373 = vmatprep.subr.mxu0 0.0
        %374 = vmatpush1.msra.mxu0 0.0
        %375 = vmatprep.subr.mxu0 0.0
        %376 = vmatpush1.msra.mxu0 0.0
        %377 = vmatprep.subr.mxu0 0.0
        %378 = vmatpush1.msra.mxu0 0.0
        %379 = vmatprep.subr.mxu0 0.0
        %380 = vmatpush1.msra.mxu0 0.0
        %381 = vmatprep.subr.mxu0 0.0
        %382 = vmatpush1.msra.mxu0 0.0
        %383 = vmatprep.subr.mxu0 0.0
        %384 = vmatpush1.msra.mxu0 0.0
        %385 = vmatprep.subr.mxu0 0.0
        %386 = vmatpush1.msra.mxu0 0.0
        %387 = vmatprep.subr.mxu0 0.0
        %388 = vmatpush1.msra.mxu0 0.0
        %389 = vmatprep.subr.mxu0 0.0
        %390 = vmatpush1.msra.mxu0 0.0
        %391 = vmatprep.subr.mxu0 0.0
        %392 = vmatpush1.msra.mxu0 0.0
        %393 = vmatprep.subr.mxu0 0.0
        %394 = vmatpush1.msra.mxu0 0.0
        %395 = vmatprep.subr.mxu0 0.0
        %396 = vmatpush1.msra.mxu0 0.0
        %397 = vmatprep.subr.mxu0 0.0
        %398 = vmatpush1.msra.mxu0 0.0
        %399 = vmatprep.subr.mxu0 0.0
        %400 = vmatpush1.msra.mxu0 0.0
        %401 = vmatprep.mubr.f32.mxu0 0.0
        %402 = vmatmul.mubr.f32.gmra.mrb[0].mxu0 %v323
        %v403 = vpop.f32.mrb[0].mxu0
        %v404 = vadd.f32 0.0, %v403
        %v405 = vpop.f32.mrb[0].mxu0
        %v406 = vadd.f32 0.0, %v405
        %407 = vmatprep.mubr.f32.mxu0 0.0
        %408 = vmatmul.mubr.f32.gmra.mrb[0].mxu0 %v326
        %v409 = vpop.f32.mrb[0].mxu0
        %v410 = vadd.f32 0.0, %v409
        %v411 = vpop.f32.mrb[0].mxu0
        %v412 = vadd.f32 0.0, %v411
        %413 = vmatprep.mubr.f32.mxu0 0.0
        %414 = vmatmul.mubr.f32.gmra.mrb[0].mxu0 %v329
        %v415 = vpop.f32.mrb[0].mxu0
        %v416 = vpop.f32.mrb[0].mxu0
        %v417 = vadd.f32 0.0, %v416
        %418 = vmatprep.mubr.f32.mxu0 0.0
        %419 = vmatmul.mubr.f32.gmra.mrb[0].mxu0 %v332
        %v420 = vpop.f32.mrb[0].mxu0
        %v421 = vpop.f32.mrb[0].mxu0
        %422 = vmatprep.mubr.f32.mxu0 0.0
        %423 = vmatmul.mubr.f32.gmra.mrb[0].mxu0 %v335
        %v424 = vpop.f32.mrb[0].mxu0
        %v425 = vpop.f32.mrb[0].mxu0
        %426 = vdwg.mxu0
        %427 = vmatprep.subr.mxu0 %v306
        %428 = vmatpush1.msra.mxu0 %v305
        %429 = vmatprep.subr.mxu0 %v315
        %430 = vmatpush1.msra.mxu0 %v314
        %431 = vmatprep.subr.mxu0 0.0
        %432 = vmatpush1.msra.mxu0 0.0
        %433 = vmatprep.subr.mxu0 0.0
        %434 = vmatpush1.msra.mxu0 0.0
        %435 = vmatprep.subr.mxu0 0.0
        %436 = vmatpush1.msra.mxu0 0.0
        %437 = vmatprep.subr.mxu0 0.0
        %438 = vmatpush1.msra.mxu0 0.0
        %439 = vmatprep.subr.mxu0 0.0
        %440 = vmatpush1.msra.mxu0 0.0
        %441 = vmatprep.subr.mxu0 0.0
        %442 = vmatpush1.msra.mxu0 0.0
        %443 = vmatprep.subr.mxu0 0.0
        %444 = vmatpush1.msra.mxu0 0.0
        %445 = vmatprep.subr.mxu0 0.0
        %446 = vmatpush1.msra.mxu0 0.0
        %447 = vmatprep.subr.mxu0 0.0
        %448 = vmatpush1.msra.mxu0 0.0
        %449 = vmatprep.subr.mxu0 0.0
        %450 = vmatpush1.msra.mxu0 0.0
        %451 = vmatprep.subr.mxu0 0.0
        %452 = vmatpush1.msra.mxu0 0.0
        %453 = vmatprep.subr.mxu0 0.0
        %454 = vmatpush1.msra.mxu0 0.0
        %455 = vmatprep.subr.mxu0 0.0
        %456 = vmatpush1.msra.mxu0 0.0
        %457 = vmatprep.subr.mxu0 0.0
        %458 = vmatpush1.msra.mxu0 0.0
        %459 = vmatprep.subr.mxu0 0.0
        %460 = vmatpush1.msra.mxu0 0.0
        %461 = vmatprep.subr.mxu0 0.0
        %462 = vmatpush1.msra.mxu0 0.0
        %463 = vmatprep.subr.mxu0 0.0
        %464 = vmatpush1.msra.mxu0 0.0
        %465 = vmatprep.subr.mxu0 0.0
        %466 = vmatpush1.msra.mxu0 0.0
        %467 = vmatprep.subr.mxu0 0.0
        %468 = vmatpush1.msra.mxu0 0.0
        %469 = vmatprep.subr.mxu0 0.0
        %470 = vmatpush1.msra.mxu0 0.0
        %471 = vmatprep.subr.mxu0 0.0
        %472 = vmatpush1.msra.mxu0 0.0
        %473 = vmatprep.subr.mxu0 0.0
        %474 = vmatpush1.msra.mxu0 0.0
        %475 = vmatprep.subr.mxu0 0.0
        %476 = vmatpush1.msra.mxu0 0.0
        %477 = vmatprep.subr.mxu0 0.0
        %478 = vmatpush1.msra.mxu0 0.0
        %479 = vmatprep.subr.mxu0 0.0
        %480 = vmatpush1.msra.mxu0 0.0
        %481 = vmatprep.subr.mxu0 0.0
        %482 = vmatpush1.msra.mxu0 0.0
        %483 = vmatprep.subr.mxu0 0.0
        %484 = vmatpush1.msra.mxu0 0.0
        %485 = vmatprep.subr.mxu0 0.0
        %486 = vmatpush1.msra.mxu0 0.0
        %487 = vmatprep.subr.mxu0 0.0
        %488 = vmatpush1.msra.mxu0 0.0
        %489 = vmatprep.subr.mxu0 0.0
        %490 = vmatpush1.msra.mxu0 0.0
        %491 = vmatprep.mubr.f32.mxu0 0.0
        %492 = vmatmul.mubr.f32.gmra.mrb[0].mxu0 %v323
        %v493 = vpop.f32.mrb[0].mxu0
        %v494 = vadd.f32 0.0, %v493
        %v495 = vpop.f32.mrb[0].mxu0
        %496 = vmatprep.mubr.f32.mxu0 0.0
        %497 = vmatmul.mubr.f32.gmra.mrb[0].mxu0 %v326
        %v498 = vpop.f32.mrb[0].mxu0
        %v499 = vadd.f32 0.0, %v498
        %v500 = vpop.f32.mrb[0].mxu0
        %v501 = vadd.f32 0.0, %v500
        %502 = vmatprep.mubr.f32.mxu0 0.0
        %503 = vmatmul.mubr.f32.gmra.mrb[0].mxu0 %v329
        %v504 = vpop.f32.mrb[0].mxu0
        %v505 = vadd.f32 0.0, %v504
        %v506 = vpop.f32.mrb[0].mxu0
        %v507 = vadd.f32 0.0, %v506
        %508 = vmatprep.mubr.f32.mxu0 0.0
        %509 = vmatmul.mubr.f32.gmra.mrb[0].mxu0 %v332
        %v510 = vpop.f32.mrb[0].mxu0
        %v511 = vpop.f32.mrb[0].mxu0
        %512 = vmatprep.mubr.f32.mxu0 0.0
        %513 = vmatmul.mubr.f32.gmra.mrb[0].mxu0 %v335
        %v514 = vpop.f32.mrb[0].mxu0
        %v515 = vpop.f32.mrb[0].mxu0
        %516 = vdwg.mxu0
        %517 = vmatprep.subr.mxu0 %v308
        %518 = vmatpush1.msra.mxu0 %v307
        %519 = vmatprep.subr.mxu0 %v317
        %520 = vmatpush1.msra.mxu0 %v316
        %521 = vmatprep.subr.mxu0 0.0
        %522 = vmatpush1.msra.mxu0 0.0
        %523 = vmatprep.subr.mxu0 0.0
        %524 = vmatpush1.msra.mxu0 0.0
        %525 = vmatprep.subr.mxu0 0.0
        %526 = vmatpush1.msra.mxu0 0.0
        %527 = vmatprep.subr.mxu0 0.0
        %528 = vmatpush1.msra.mxu0 0.0
        %529 = vmatprep.subr.mxu0 0.0
        %530 = vmatpush1.msra.mxu0 0.0
        %531 = vmatprep.subr.mxu0 0.0
        %532 = vmatpush1.msra.mxu0 0.0
        %533 = vmatprep.subr.mxu0 0.0
        %534 = vmatpush1.msra.mxu0 0.0
        %535 = vmatprep.subr.mxu0 0.0
        %536 = vmatpush1.msra.mxu0 0.0
        %537 = vmatprep.subr.mxu0 0.0
        %538 = vmatpush1.msra.mxu0 0.0
        %539 = vmatprep.subr.mxu0 0.0
        %540 = vmatpush1.msra.mxu0 0.0
        %541 = vmatprep.subr.mxu0 0.0
        %542 = vmatpush1.msra.mxu0 0.0
        %543 = vmatprep.subr.mxu0 0.0
        %544 = vmatpush1.msra.mxu0 0.0
        %545 = vmatprep.subr.mxu0 0.0
        %546 = vmatpush1.msra.mxu0 0.0
        %547 = vmatprep.subr.mxu0 0.0
        %548 = vmatpush1.msra.mxu0 0.0
        %549 = vmatprep.subr.mxu0 0.0
        %550 = vmatpush1.msra.mxu0 0.0
        %551 = vmatprep.subr.mxu0 0.0
        %552 = vmatpush1.msra.mxu0 0.0
        %553 = vmatprep.subr.mxu0 0.0
        %554 = vmatpush1.msra.mxu0 0.0
        %555 = vmatprep.subr.mxu0 0.0
        %556 = vmatpush1.msra.mxu0 0.0
        %557 = vmatprep.subr.mxu0 0.0
        %558 = vmatpush1.msra.mxu0 0.0
        %559 = vmatprep.subr.mxu0 0.0
        %560 = vmatpush1.msra.mxu0 0.0
        %561 = vmatprep.subr.mxu0 0.0
        %562 = vmatpush1.msra.mxu0 0.0
        %563 = vmatprep.subr.mxu0 0.0
        %564 = vmatpush1.msra.mxu0 0.0
        %565 = vmatprep.subr.mxu0 0.0
        %566 = vmatpush1.msra.mxu0 0.0
        %567 = vmatprep.subr.mxu0 0.0
        %568 = vmatpush1.msra.mxu0 0.0
        %569 = vmatprep.subr.mxu0 0.0
        %570 = vmatpush1.msra.mxu0 0.0
        %571 = vmatprep.subr.mxu0 0.0
        %572 = vmatpush1.msra.mxu0 0.0
        %573 = vmatprep.subr.mxu0 0.0
        %574 = vmatpush1.msra.mxu0 0.0
        %575 = vmatprep.subr.mxu0 0.0
        %576 = vmatpush1.msra.mxu0 0.0
        %577 = vmatprep.subr.mxu0 0.0
        %578 = vmatpush1.msra.mxu0 0.0
        %579 = vmatprep.subr.mxu0 0.0
        %580 = vmatpush1.msra.mxu0 0.0
        %581 = vmatprep.mubr.f32.mxu0 0.0
        %582 = vmatmul.mubr.f32.gmra.mrb[0].mxu0 %v323
        %v583 = vpop.f32.mrb[0].mxu0
        %v584 = vpop.f32.mrb[0].mxu0
        %585 = vmatprep.mubr.f32.mxu0 0.0
        %586 = vmatmul.mubr.f32.gmra.mrb[0].mxu0 %v326
        %v587 = vpop.f32.mrb[0].mxu0
        %v588 = vadd.f32 0.0, %v587
        %v589 = vpop.f32.mrb[0].mxu0
        %v590 = vadd.f32 0.0, %v589
        %591 = vmatprep.mubr.f32.mxu0 0.0
        %592 = vmatmul.mubr.f32.gmra.mrb[0].mxu0 %v329
        %v593 = vpop.f32.mrb[0].mxu0
        %v594 = vadd.f32 0.0, %v593
        %v595 = vpop.f32.mrb[0].mxu0
        %v596 = vadd.f32 0.0, %v595
        %597 = vmatprep.mubr.f32.mxu0 0.0
        %598 = vmatmul.mubr.f32.gmra.mrb[0].mxu0 %v332
        %v599 = vpop.f32.mrb[0].mxu0
        %v600 = vadd.f32 0.0, %v599
        %v601 = vpop.f32.mrb[0].mxu0
        %v602 = vadd.f32 0.0, %v601
        %603 = vmatprep.mubr.f32.mxu0 0.0
        %604 = vmatmul.mubr.f32.gmra.mrb[0].mxu0 %v335
        %v605 = vpop.f32.mrb[0].mxu0
        %v606 = vpop.f32.mrb[0].mxu0
        %607 = vdwg.mxu0
        %608 = vmatprep.subr.mxu0 %v310
        %609 = vmatpush1.msra.mxu0 %v309
        %610 = vmatprep.subr.mxu0 %v319
        %611 = vmatpush1.msra.mxu0 %v318
        %612 = vmatprep.subr.mxu0 0.0
        %613 = vmatpush1.msra.mxu0 0.0
        %614 = vmatprep.subr.mxu0 0.0
        %615 = vmatpush1.msra.mxu0 0.0
        %616 = vmatprep.subr.mxu0 0.0
        %617 = vmatpush1.msra.mxu0 0.0
        %618 = vmatprep.subr.mxu0 0.0
        %619 = vmatpush1.msra.mxu0 0.0
        %620 = vmatprep.subr.mxu0 0.0
        %621 = vmatpush1.msra.mxu0 0.0
        %622 = vmatprep.subr.mxu0 0.0
        %623 = vmatpush1.msra.mxu0 0.0
        %624 = vmatprep.subr.mxu0 0.0
        %625 = vmatpush1.msra.mxu0 0.0
        %626 = vmatprep.subr.mxu0 0.0
        %627 = vmatpush1.msra.mxu0 0.0
        %628 = vmatprep.subr.mxu0 0.0
        %629 = vmatpush1.msra.mxu0 0.0
        %630 = vmatprep.subr.mxu0 0.0
        %631 = vmatpush1.msra.mxu0 0.0
        %632 = vmatprep.subr.mxu0 0.0
        %633 = vmatpush1.msra.mxu0 0.0
        %634 = vmatprep.subr.mxu0 0.0
        %635 = vmatpush1.msra.mxu0 0.0
        %636 = vmatprep.subr.mxu0 0.0
        %637 = vmatpush1.msra.mxu0 0.0
        %638 = vmatprep.subr.mxu0 0.0
        %639 = vmatpush1.msra.mxu0 0.0
        %640 = vmatprep.subr.mxu0 0.0
        %641 = vmatpush1.msra.mxu0 0.0
        %642 = vmatprep.subr.mxu0 0.0
        %643 = vmatpush1.msra.mxu0 0.0
        %644 = vmatprep.subr.mxu0 0.0
        %645 = vmatpush1.msra.mxu0 0.0
        %646 = vmatprep.subr.mxu0 0.0
        %647 = vmatpush1.msra.mxu0 0.0
        %648 = vmatprep.subr.mxu0 0.0
        %649 = vmatpush1.msra.mxu0 0.0
        %650 = vmatprep.subr.mxu0 0.0
        %651 = vmatpush1.msra.mxu0 0.0
        %652 = vmatprep.subr.mxu0 0.0
        %653 = vmatpush1.msra.mxu0 0.0
        %654 = vmatprep.subr.mxu0 0.0
        %655 = vmatpush1.msra.mxu0 0.0
        %656 = vmatprep.subr.mxu0 0.0
        %657 = vmatpush1.msra.mxu0 0.0
        %658 = vmatprep.subr.mxu0 0.0
        %659 = vmatpush1.msra.mxu0 0.0
        %660 = vmatprep.subr.mxu0 0.0
        %661 = vmatpush1.msra.mxu0 0.0
        %662 = vmatprep.subr.mxu0 0.0
        %663 = vmatpush1.msra.mxu0 0.0
        %664 = vmatprep.subr.mxu0 0.0
        %665 = vmatpush1.msra.mxu0 0.0
        %666 = vmatprep.subr.mxu0 0.0
        %667 = vmatpush1.msra.mxu0 0.0
        %668 = vmatprep.subr.mxu0 0.0
        %669 = vmatpush1.msra.mxu0 0.0
        %670 = vmatprep.subr.mxu0 0.0
        %671 = vmatpush1.msra.mxu0 0.0
        %672 = vmatprep.mubr.f32.mxu0 0.0
        %673 = vmatmul.mubr.f32.gmra.mrb[0].mxu0 %v323
        %v674 = vpop.f32.mrb[0].mxu0
        %v675 = vpop.f32.mrb[0].mxu0
        %676 = vmatprep.mubr.f32.mxu0 0.0
        %677 = vmatmul.mubr.f32.gmra.mrb[0].mxu0 %v326
        %v678 = vpop.f32.mrb[0].mxu0
        %v679 = vpop.f32.mrb[0].mxu0
        %680 = vmatprep.mubr.f32.mxu0 0.0
        %681 = vmatmul.mubr.f32.gmra.mrb[0].mxu0 %v329
        %v682 = vpop.f32.mrb[0].mxu0
        %v683 = vadd.f32 0.0, %v682
        %v684 = vpop.f32.mrb[0].mxu0
        %v685 = vadd.f32 0.0, %v684
        %686 = vmatprep.mubr.f32.mxu0 0.0
        %687 = vmatmul.mubr.f32.gmra.mrb[0].mxu0 %v332
        %v688 = vpop.f32.mrb[0].mxu0
        %v689 = vadd.f32 0.0, %v688
        %v690 = vpop.f32.mrb[0].mxu0
        %v691 = vadd.f32 0.0, %v690
        %692 = vmatprep.mubr.f32.mxu0 0.0
        %693 = vmatmul.mubr.f32.gmra.mrb[0].mxu0 %v335
        %v694 = vpop.f32.mrb[0].mxu0
        %v695 = vpop.f32.mrb[0].mxu0
        %v696 = vadd.f32 0.0, %v695
        %697 = vdwg.mxu0
        %698 = vmatprep.subr.mxu0 0.0
        %699 = vmatpush1.msra.mxu0 %v311
        %700 = vmatprep.subr.mxu0 0.0
        %701 = vmatpush1.msra.mxu0 %v320
        %702 = vmatprep.subr.mxu0 0.0
        %703 = vmatpush1.msra.mxu0 0.0
        %704 = vmatprep.subr.mxu0 0.0
        %705 = vmatpush1.msra.mxu0 0.0
        %706 = vmatprep.subr.mxu0 0.0
        %707 = vmatpush1.msra.mxu0 0.0
        %708 = vmatprep.subr.mxu0 0.0
        %709 = vmatpush1.msra.mxu0 0.0
        %710 = vmatprep.subr.mxu0 0.0
        %711 = vmatpush1.msra.mxu0 0.0
        %712 = vmatprep.subr.mxu0 0.0
        %713 = vmatpush1.msra.mxu0 0.0
        %714 = vmatprep.subr.mxu0 0.0
        %715 = vmatpush1.msra.mxu0 0.0
        %716 = vmatprep.subr.mxu0 0.0
        %717 = vmatpush1.msra.mxu0 0.0
        %718 = vmatprep.subr.mxu0 0.0
        %719 = vmatpush1.msra.mxu0 0.0
        %720 = vmatprep.subr.mxu0 0.0
        %721 = vmatpush1.msra.mxu0 0.0
        %722 = vmatprep.subr.mxu0 0.0
        %723 = vmatpush1.msra.mxu0 0.0
        %724 = vmatprep.subr.mxu0 0.0
        %725 = vmatpush1.msra.mxu0 0.0
        %726 = vmatprep.subr.mxu0 0.0
        %727 = vmatpush1.msra.mxu0 0.0
        %728 = vmatprep.subr.mxu0 0.0
        %729 = vmatpush1.msra.mxu0 0.0
        %730 = vmatprep.subr.mxu0 0.0
        %731 = vmatpush1.msra.mxu0 0.0
        %732 = vmatprep.subr.mxu0 0.0
        %733 = vmatpush1.msra.mxu0 0.0
        %734 = vmatprep.subr.mxu0 0.0
        %735 = vmatpush1.msra.mxu0 0.0
        %736 = vmatprep.subr.mxu0 0.0
        %737 = vmatpush1.msra.mxu0 0.0
        %738 = vmatprep.subr.mxu0 0.0
        %739 = vmatpush1.msra.mxu0 0.0
        %740 = vmatprep.subr.mxu0 0.0
        %741 = vmatpush1.msra.mxu0 0.0
        %742 = vmatprep.subr.mxu0 0.0
        %743 = vmatpush1.msra.mxu0 0.0
        %744 = vmatprep.subr.mxu0 0.0
        %745 = vmatpush1.msra.mxu0 0.0
        %746 = vmatprep.subr.mxu0 0.0
        %747 = vmatpush1.msra.mxu0 0.0
        %748 = vmatprep.subr.mxu0 0.0
        %749 = vmatpush1.msra.mxu0 0.0
        %750 = vmatprep.subr.mxu0 0.0
        %751 = vmatpush1.msra.mxu0 0.0
        %752 = vmatprep.subr.mxu0 0.0
        %753 = vmatpush1.msra.mxu0 0.0
        %754 = vmatprep.subr.mxu0 0.0
        %755 = vmatpush1.msra.mxu0 0.0
        %756 = vmatprep.subr.mxu0 0.0
        %757 = vmatpush1.msra.mxu0 0.0
        %758 = vmatprep.subr.mxu0 0.0
        %759 = vmatpush1.msra.mxu0 0.0
        %760 = vmatprep.subr.mxu0 0.0
        %761 = vmatpush1.msra.mxu0 0.0
        %762 = vmatprep.mubr.f32.mxu0 0.0
        %763 = vmatmul.mubr.f32.gmra.mrb[0].mxu0 %v323
        %v764 = vpop.f32.mrb[0].mxu0
        %v765 = vpop.f32.mrb[0].mxu0
        %766 = vmatprep.mubr.f32.mxu0 0.0
        %767 = vmatmul.mubr.f32.gmra.mrb[0].mxu0 %v326
        %v768 = vpop.f32.mrb[0].mxu0
        %v769 = vpop.f32.mrb[0].mxu0
        %770 = vmatprep.mubr.f32.mxu0 0.0
        %771 = vmatmul.mubr.f32.gmra.mrb[0].mxu0 %v329
        %v772 = vpop.f32.mrb[0].mxu0
        %v773 = vadd.f32 0.0, %v772
        %v774 = vpop.f32.mrb[0].mxu0
        %775 = vmatprep.mubr.f32.mxu0 0.0
        %776 = vmatmul.mubr.f32.gmra.mrb[0].mxu0 %v332
        %v777 = vpop.f32.mrb[0].mxu0
        %v778 = vadd.f32 0.0, %v777
        %v779 = vpop.f32.mrb[0].mxu0
        %780 = vmatprep.mubr.f32.mxu0 0.0
        %781 = vmatmul.mubr.f32.gmra.mrb[0].mxu0 %v335
        %v782 = vpop.f32.mrb[0].mxu0
        %v783 = vadd.f32 0.0, %v782
        %v784 = vpop.f32.mrb[0].mxu0
        %785 = vdwg.mxu0
        %v786 = vld [vmem:[%s3] sm:$0x1]
        %v788 = vlaneseq
        %v789 = vshrl.u32 %v788, 7
        %v790 = vsub.s32 0, %v789
        %v791 = vrot.slane %v786, %v790
        %v793 = vadd.f32 %v791, %v404
        %v794 = vadd.f32 %v791, %v410
        %vm798 = vcmask 1046528
        %v799 = vrot.slane %v406, 1
        %v800 = vrot.slane %v412, 1
        %v801 = vsel %vm798, %v799, %v800
        %v802 = vrot.slane %v417, 1
        %v803 = vsel %vm798, %v800, %v802
        %v806 = vadd.f32 %v793, %v801
        %v807 = vadd.f32 %v794, %v803
        %vm811 = vcmask 1045504
        %v812 = vrot.slane %v494, 2
        %v813 = vrot.slane %v499, 2
        %v814 = vsel %vm811, %v812, %v813
        %v815 = vrot.slane %v505, 2
        %v816 = vsel %vm811, %v813, %v815
        %v819 = vadd.f32 %v806, %v814
        %v820 = vadd.f32 %v807, %v816
        %v821 = vadd.f32 %v819, %v501
        %v822 = vadd.f32 %v820, %v507
        %v826 = vrot.slane %v588, 1
        %v827 = vrot.slane %v594, 1
        %v828 = vsel %vm798, %v826, %v827
        %v829 = vrot.slane %v600, 1
        %v830 = vsel %vm798, %v827, %v829
        %v833 = vadd.f32 %v821, %v828
        %v834 = vadd.f32 %v822, %v830
        %v838 = vrot.slane %v590, 2
        %v839 = vrot.slane %v596, 2
        %v840 = vsel %vm811, %v838, %v839
        %v841 = vrot.slane %v602, 2
        %v842 = vsel %vm811, %v839, %v841
        %v845 = vadd.f32 %v833, %v840
        %v846 = vadd.f32 %v834, %v842
        %v847 = vadd.f32 %v845, %v683
        %v848 = vadd.f32 %v846, %v689
        %v852 = vrot.slane %v685, 1
        %v853 = vrot.slane %v691, 1
        %v854 = vsel %vm798, %v852, %v853
        %v855 = vrot.slane %v696, 1
        %v856 = vsel %vm798, %v853, %v855
        %v859 = vadd.f32 %v847, %v854
        %v860 = vadd.f32 %v848, %v856
        %v864 = vrot.slane %v773, 2
        %v865 = vrot.slane %v778, 2
        %v866 = vsel %vm811, %v864, %v865
        %v867 = vrot.slane %v783, 2
        %v868 = vsel %vm811, %v865, %v867
        %v871 = vadd.f32 %v859, %v866
        %v872 = vadd.f32 %v860, %v868
        %873 = vst [vmem:[%s294] sm:$0xff] %v871
        %874 = vst [vmem:[%s294 + $0x8] sm:$0xff] %v872
        %s875 = sand.u32 %s146, 1
        %s876 = scalar_lea.sflag [#allocation4], %s875
        %s877 = sand.u32 %s146, 1
        %s878 = smul.addr %s877, 16
        %s879 = scalar_lea.vmem [#allocation8], %s878
        // Predicated region
        $region49: #{tpu_custom_call.1} parent=35 // pred_check
          %p880 = pneg %p156
        $region50: #{tpu_custom_call.1} parent=35 // pred_check_branch
          %882 = sbr.rel (%p880) target = $region52
        $region51: #{tpu_custom_call.1} parent=35 // pred_region
          %s883 = smul.u32 2, %s29
          %s885 = ssub.s32 256, 256
          %886 = vsyncadd %s876, %s885
          %s887 = smul.addr %s28, 6
          %s888 = sadd.s32 %s883, %s887
          %s889 = smul.addr %s888, 128
          %s890 = scalar_lea.hbm %s4, %s889
          %s891 = sshll.u32 %s879, 4
          %s892 = int_to_ptr.vmem [resolvable:$true] %s891
          %897 = dma.vmem_to_hbm [thread:$0]  %s892, 256, %s890, %s876, 128, 128, 8
        $region52: #{tpu_custom_call.1} parent=35 // pred_fallthru
          _
      $region36: #{tpu_custom_call.1} parent=5 // pred_fallthru
        _
      %p898 = scmp.le.s32.totalorder 2, %s19
      // Predicated region
      $region53: #{tpu_custom_call.1} parent=5 // pred_check
        %p899 = pneg %p898
      $region54: #{tpu_custom_call.1} parent=5 // pred_check_branch
        %901 = sbr.rel (%p899) target = $region56
      $region55: #{tpu_custom_call.1} parent=5 // pred_region
        %s902 = ssub.s32 %s19, 2
        // Predicated region
        $region57: #{tpu_custom_call.1} parent=55 // pred_check
          %p903 = pneg %p162
        $region58: #{tpu_custom_call.1} parent=55 // pred_check_branch
          %905 = sbr.rel (%p903) target = $region60
        $region59: #{tpu_custom_call.1} parent=55 // pred_region
          %s906 = sand.u32 %s147, 1
          %s907 = scalar_lea.sflag [#allocation4], %s906
          %s908 = sand.u32 %s147, 1
          %s909 = smul.addr %s908, 16
          %s910 = scalar_lea.vmem [#allocation8], %s909
          %911 = dma.done %s907, 256
        $region60: #{tpu_custom_call.1} parent=55 // pred_fallthru
          _
      $region56: #{tpu_custom_call.1} parent=5 // pred_fallthru
        _
    $region6: #{tpu_custom_call.1} parent=1 // loop_footer
      %s23 = sadd.s32 1, %s19
    $region7: #{tpu_custom_call.1} parent=1 // loop_footer_branch
      %18 = sbr.rel target = $region3
    $region8: #{tpu_custom_call.1} parent=1 // loop_exit
      _
    %912 = vsyncpa [#allocation3], 1
    %s913 = scalar_lea.sflag [#allocation3], 1
    %914 = vsyncpa %s913, 1
    %915 = vsyncpa [#allocation6], 1
    %s916 = scalar_lea.sflag [#allocation6], 1
    %917 = vsyncpa %s916, 1
    %918 = vsyncpa [#allocation4], 1
    %s919 = scalar_lea.sflag [#allocation4], 1
    %920 = vsyncpa %s919, 1

</llo_original>
